<compile_context>
chip_gen: v5e
topology: v5e:2x2
jax: 0.10.0
libtpu: 0.0.40
codegen_flags: <defaults>
</compile_context>

<pallas_src>
import functools

import jax
import jax.numpy as jnp
from jax.experimental import pallas as pl
from jax.experimental.pallas import tpu as pltpu


# ---------------------------------------------------------------------------
# Path A: fully fused kernel.  Grid = (M tile,), all (L+2) weights resident.
# Weights are stored [in_features, out_features] so every matmul is plain h @ W.
# ---------------------------------------------------------------------------

def _make_fused_kernel(n_blocks, with_hid):
    if with_hid:
        def kernel(x_ref, w_ref, b_ref, y_ref, hid_ref):
            h = jnp.dot(x_ref[...], w_ref[0],
                        preferred_element_type=jnp.float32) + b_ref[0]
            for l in range(n_blocks):
                hid_ref[l] = h.astype(hid_ref.dtype)       # state entering block l
                h = jnp.maximum(
                    jnp.dot(h, w_ref[l + 1],
                            preferred_element_type=jnp.float32) + b_ref[l + 1],
                    0.0)
            y_ref[...] = (jnp.dot(h, w_ref[n_blocks + 1],
                                  preferred_element_type=jnp.float32)
                          + b_ref[n_blocks + 1]).astype(y_ref.dtype)
    else:
        def kernel(x_ref, w_ref, b_ref, y_ref):
            h = jnp.dot(x_ref[...], w_ref[0],
                        preferred_element_type=jnp.float32) + b_ref[0]
            for l in range(n_blocks):
                h = jnp.maximum(
                    jnp.dot(h, w_ref[l + 1],
                            preferred_element_type=jnp.float32) + b_ref[l + 1],
                    0.0)
            y_ref[...] = (jnp.dot(h, w_ref[n_blocks + 1],
                                  preferred_element_type=jnp.float32)
                          + b_ref[n_blocks + 1]).astype(y_ref.dtype)
    return kernel


# ---------------------------------------------------------------------------
# Path B: streaming fallback.  Grid = (M tile, layer step l), l in [0, L+2):
#   l == 0        : pre  Linear            (state <- x @ Wpre + bpre)
#   1 <= l <= L   : block l-1              (record hid, state <- relu(state @ Wl + bl))
#   l == L+1      : post Linear            (y <- state @ Wpost + bpost)
# ---------------------------------------------------------------------------

def _stream_kernel_hid(x_ref, w_ref, b_ref, y_ref, hid_ref, state_ref):
    l = pl.program_id(1)
    last = pl.num_programs(1) - 1

    @pl.when(l == 0)
    def _():
        state_ref[...] = (
            jnp.dot(x_ref[...], w_ref[0], preferred_element_type=jnp.float32)
            + b_ref[0]
        )

    @pl.when(jnp.logical_and(l > 0, l < last))
    def _():
        s = state_ref[...]                      # single load, reused twice
        hid_ref[0] = s.astype(hid_ref.dtype)    # hidden state entering block l-1
        h = jnp.dot(s, w_ref[0], preferred_element_type=jnp.float32) + b_ref[0]
        state_ref[...] = jnp.maximum(h, 0.0)

    @pl.when(l == last)
    def _():
        y_ref[...] = (
            jnp.dot(state_ref[...], w_ref[0], preferred_element_type=jnp.float32)
            + b_ref[0]
        ).astype(y_ref.dtype)


def _stream_kernel_nohid(x_ref, w_ref, b_ref, y_ref, state_ref):
    l = pl.program_id(1)
    last = pl.num_programs(1) - 1

    @pl.when(l == 0)
    def _():
        state_ref[...] = (
            jnp.dot(x_ref[...], w_ref[0], preferred_element_type=jnp.float32)
            + b_ref[0]
        )

    @pl.when(jnp.logical_and(l > 0, l < last))
    def _():
        h = (jnp.dot(state_ref[...], w_ref[0], preferred_element_type=jnp.float32)
             + b_ref[0])
        state_ref[...] = jnp.maximum(h, 0.0)

    @pl.when(l == last)
    def _():
        y_ref[...] = (
            jnp.dot(state_ref[...], w_ref[0], preferred_element_type=jnp.float32)
            + b_ref[0]
        ).astype(y_ref.dtype)


# ---------------------------------------------------------------------------
# Wrapper
# ---------------------------------------------------------------------------

def _round_up(a, b):
    return (a + b - 1) // b * b


def _choose_tm(M):
    # Pick the largest reasonable tile that divides M (avoids the full-array pad copy).
    if M <= 512:
        return _round_up(M, 8)
    for tm in (512, 256, 128):
        if M % tm == 0:
            return tm
    return 512  # pads only the ragged tail tile


_FUSED_BUDGET = 28 << 20      # conservative VMEM budget, safe on v7x (64 MiB physical)
_FUSED_MAX_LAYERS = 64        # cap static unrolling of the layer loop


@functools.partial(jax.jit, static_argnames=("return_hidden_states", "force_stream"))
def model_pipe_forward(x, params, return_hidden_states=False, force_stream=False):
    B, S, H = x.shape
    M = B * S
    L = params["w_blocks"].shape[0]
    n_steps = L + 2

    want_hid = bool(return_hidden_states) and L > 0

    # --- one-time XLA-side prep: pre-transpose to [in, out] and stack pre/blocks/post ---
    w_stack = jnp.concatenate(
        [params["w_pre"].T[None],
         jnp.swapaxes(params["w_blocks"], 1, 2),
         params["w_post"].T[None]], axis=0)                       # (L+2, H, H)
    b_stack = jnp.concatenate(
        [params["b_pre"][None],
         params["b_blocks"],
         params["b_post"][None]], axis=0)                         # (L+2, 1, H)

    # --- token tiling ---
    TM = _choose_tm(M)
    M_pad = _round_up(M, TM)
    n_mt = M_pad // TM
    # Let the "parallel" M axis split across the two v7x TensorCores when possible.
    if n_mt == 1 and TM >= 256 and TM % 16 == 0:
        TM //= 2
        n_mt = 2

    x2 = x.reshape(M, H)
    if M_pad != M:
        x2 = jnp.pad(x2, ((0, M_pad - M), (0, 0)))

    dt = 4  # f32 bytes
    fused_bytes = (2 * (L + 2) * H * H * dt              # resident weight stack (2x: be safe)
                   + 2 * (L + 2) * H * dt                # biases
                   + 2 * 2 * TM * H * dt                 # x + y tiles (double-buffered)
                   + (2 * L * TM * H * dt if want_hid else 0)   # hid tile
                   + 4 * TM * H * dt)                    # activation temporaries
    use_fused = (not force_stream) and fused_bytes <= _FUSED_BUDGET and L <= _FUSED_MAX_LAYERS

    flops = 2 * M_pad * H * H * n_steps
    bytes_accessed = (w_stack.size + b_stack.size + M_pad * H + M_pad * H
                      + (L * M_pad * H if want_hid else 0)) * dt
    cost = pl.CostEstimate(flops=flops, transcendentals=0, bytes_accessed=bytes_accessed)

    y_shape = jax.ShapeDtypeStruct((M_pad, H), x.dtype)
    hid_shape = jax.ShapeDtypeStruct((L, M_pad, H), x.dtype)

    if use_fused:
        # ---------------- Path A: resident weights, layers inside the kernel ----------
        vmem_limit = min(max(int(fused_bytes * 1.25), 16 << 20), 48 << 20)
        compiler_params = pltpu.CompilerParams(
            dimension_semantics=("parallel",),
            vmem_limit_bytes=vmem_limit)

        in_specs = [
            pl.BlockSpec((TM, H), lambda mi: (mi, 0)),            # x tile
            pl.BlockSpec((L + 2, H, H), lambda mi: (0, 0, 0)),    # full weight stack (resident)
            pl.BlockSpec((L + 2, 1, H), lambda mi: (0, 0, 0)),    # full bias stack (resident)
        ]
        y_spec = pl.BlockSpec((TM, H), lambda mi: (mi, 0))

        if want_hid:
            out_specs = [y_spec, pl.BlockSpec((L, TM, H), lambda mi: (0, mi, 0))]
            out_shape = (y_shape, hid_shape)
        else:
            out_specs = [y_spec]
            out_shape = (y_shape,)

        grid_spec = pltpu.PrefetchScalarGridSpec(
            num_scalar_prefetch=0, grid=(n_mt,),
            in_specs=in_specs, out_specs=out_specs)

        outs = pl.pallas_call(
            _make_fused_kernel(L, want_hid),
            out_shape=out_shape,
            grid_spec=grid_spec,
            compiler_params=compiler_params,
            cost_estimate=cost,
        )(x2, w_stack, b_stack)
    else:
        # ---------------- Path B: stream one weight per (tile, layer) grid step -------
        # TODO(synk): for very large H on v7x, additionally tile the weight output dim
        #             ((1, H, TN) blocks, TN multiple of 256) so a single block fits VMEM.
        stream_bytes = (2 * H * H * dt + 2 * H * dt
                        + 2 * 2 * TM * H * dt
                        + (2 * TM * H * dt if want_hid else 0)
                        + TM * H * dt)
        vmem_limit = min(max(int(stream_bytes * 1.25), 16 << 20), 56 << 20)
        compiler_params = pltpu.CompilerParams(
            dimension_semantics=("parallel", "arbitrary"),
            vmem_limit_bytes=vmem_limit)

        in_specs = [
            pl.BlockSpec((TM, H), lambda mi, l: (mi, 0)),         # x tile (resident per M tile)
            pl.BlockSpec((1, H, H), lambda mi, l: (l, 0, 0)),     # stacked weight l
            pl.BlockSpec((1, 1, H), lambda mi, l: (l, 0, 0)),     # stacked bias l
        ]
        y_spec = pl.BlockSpec((TM, H), lambda mi, l: (mi, 0))     # resident across layer axis
        scratch = [pltpu.VMEM((TM, H), jnp.float32)]              # activation carry per M tile

        if want_hid:
            def hid_map(mi, l):
                # hidden-state slice written at step l (1..L) is layer block l-1; clamp so the
                # mapping stays in range (and unchanged) on the pre / post steps.
                return (jnp.maximum(jnp.minimum(l - 1, L - 1), 0), mi, 0)

            grid_spec = pltpu.PrefetchScalarGridSpec(
                num_scalar_prefetch=0, grid=(n_mt, n_steps),
                in_specs=in_specs,
                out_specs=[y_spec, pl.BlockSpec((1, TM, H), hid_map)],
                scratch_shapes=scratch)
            outs = pl.pallas_call(
                _stream_kernel_hid,
                out_shape=(y_shape, hid_shape),
                grid_spec=grid_spec,
                compiler_params=compiler_params,
                cost_estimate=cost,
            )(x2, w_stack, b_stack)
        else:
            grid_spec = pltpu.PrefetchScalarGridSpec(
                num_scalar_prefetch=0, grid=(n_mt, n_steps),
                in_specs=in_specs,
                out_specs=[y_spec],
                scratch_shapes=scratch)
            outs = pl.pallas_call(
                _stream_kernel_nohid,
                out_shape=(y_shape,),
                grid_spec=grid_spec,
                compiler_params=compiler_params,
                cost_estimate=cost,
            )(x2, w_stack, b_stack)

    if want_hid:
        y, hid = outs
        y = y[:M].reshape(B, S, H)
        hid = hid[:, :M].reshape(L, B, S, H)
        return y, hid

    (y,) = outs
    y = y[:M].reshape(B, S, H)
    if return_hidden_states:  # L == 0: no blocks -> empty hidden-state stack
        return y, jnp.zeros((0, B, S, H), x.dtype)
    return y


# ---------------------------------------------------------------------------
# Params / reference / test
# ---------------------------------------------------------------------------

def init_params(key, H, L):
    ks = jax.random.split(key, 7)
    scale = 1.0 / jnp.sqrt(H)
    return {
        "w_pre":    jax.random.normal(ks[0], (H, H), jnp.float32) * scale,
        "b_pre":    jax.random.normal(ks[1], (1, H), jnp.float32) * 0.01,
        "w_blocks": jax.random.normal(ks[2], (L, H, H), jnp.float32) * scale,
        "b_blocks": jax.random.normal(ks[3], (L, 1, H), jnp.float32) * 0.01,
        "w_post":   jax.random.normal(ks[4], (H, H), jnp.float32) * scale,
        "b_post":   jax.random.normal(ks[5], (1, H), jnp.float32) * 0.01,
    }


def reference(x, params):
    B, S, H = x.shape
    L = params["w_blocks"].shape[0]
    h = x.reshape(-1, H) @ params["w_pre"].T + params["b_pre"]
    hids = []
    for l in range(L):
        hids.append(h)
        h = jnp.maximum(h @ params["w_blocks"][l].T + params["b_blocks"][l], 0.0)
    y = h @ params["w_post"].T + params["b_post"]
    return y.reshape(B, S, H), jnp.stack(hids).reshape(L, B, S, H)


if __name__ == "__main__":
    key = jax.random.PRNGKey(0)

    # Case 1: fused path (resident weights), M multiple of 8.
    B, S, H, L = 2, 8, 128, 3
    kx, kp, key = jax.random.split(key, 3)
    x = jax.random.normal(kx, (B, S, H), jnp.float32)
    params = init_params(kp, H, L)

    y, hid = model_pipe_forward(x, params, return_hidden_states=True)
    jax.block_until_ready((y, hid))
    y_only = model_pipe_forward(x, params, return_hidden_states=False)
    jax.block_until_ready(y_only)

    y_ref, hid_ref = reference(x, params)
    assert jnp.allclose(y, y_ref, rtol=1e-3, atol=1e-3)
    assert jnp.allclose(hid, hid_ref, rtol=1e-3, atol=1e-3)
    assert jnp.allclose(y_only, y_ref, rtol=1e-3, atol=1e-3)

    # Case 2: M not a multiple of 8 (exercises token padding on the fused path).
    B2, S2, L2 = 3, 5, 2
    kx2, kp2, key = jax.random.split(key, 3)
    x2 = jax.random.normal(kx2, (B2, S2, H), jnp.float32)
    params2 = init_params(kp2, H, L2)

    y2, hid2 = model_pipe_forward(x2, params2, return_hidden_states=True)
    jax.block_until_ready((y2, hid2))
    y2_ref, hid2_ref = reference(x2, params2)
    assert jnp.allclose(y2, y2_ref, rtol=1e-3, atol=1e-3)
    assert jnp.allclose(hid2, hid2_ref, rtol=1e-3, atol=1e-3)

    # Case 3: force the streaming fallback path (same shapes as case 1).
    y3, hid3 = model_pipe_forward(x, params, return_hidden_states=True, force_stream=True)
    jax.block_until_ready((y3, hid3))
    y3_only = model_pipe_forward(x, params, return_hidden_states=False, force_stream=True)
    jax.block_until_ready(y3_only)
    assert jnp.allclose(y3, y_ref, rtol=1e-3, atol=1e-3)
    assert jnp.allclose(hid3, hid_ref, rtol=1e-3, atol=1e-3)
    assert jnp.allclose(y3_only, y_ref, rtol=1e-3, atol=1e-3)

    print("KERNEL_OK")
</pallas_src>

<mosaic_0001>
module attributes {stable_mosaic.version = 11 : i64} {
  func.func @kernel(%arg0: i32, %arg1: memref<16x128xf32, #tpu.memory_space<vmem>>, %arg2: memref<5x128x128xf32, #tpu.memory_space<vmem>>, %arg3: memref<5x1x128xf32, #tpu.memory_space<vmem>>, %arg4: memref<16x128xf32, #tpu.memory_space<vmem>>, %arg5: memref<3x16x128xf32, #tpu.memory_space<vmem>>) attributes {dimension_semantics = [#tpu.dimension_semantics<parallel>], iteration_bounds = array<i64: 1>, scalar_prefetch = 0 : i64, scratch_operands = 0 : i64, tpu.core_type = #tpu.core_type<tc>, window_params = [{transform_indices = @transform_0, window_bounds = array<i64: 16, 128>}, {pipeline_mode = #tpu.pipeline_mode<synchronous>, transform_indices = @transform_1, window_bounds = array<i64: 5, 128, 128>}, {pipeline_mode = #tpu.pipeline_mode<synchronous>, transform_indices = @transform_2, window_bounds = array<i64: 5, 1, 128>}, {transform_indices = @transform_3, window_bounds = array<i64: 16, 128>}, {transform_indices = @transform_4, window_bounds = array<i64: 3, 16, 128>}]} {
    %c0 = arith.constant 0 : index
    %c0_0 = arith.constant 0 : index
    %0 = vector.load %arg1[%c0, %c0_0] : memref<16x128xf32, #tpu.memory_space<vmem>>, vector<16x128xf32>
    %c0_1 = arith.constant 0 : index
    %c0_2 = arith.constant 0 : index
    %c0_3 = arith.constant 0 : index
    %1 = vector.load %arg2[%c0_1, %c0_2, %c0_3] : memref<5x128x128xf32, #tpu.memory_space<vmem>>, vector<1x128x128xf32>
    %2 = vector.shape_cast %1 : vector<1x128x128xf32> to vector<128x128xf32>
    %cst = arith.constant dense<0.000000e+00> : vector<16x128xf32>
    %3 = tpu.matmul %0, %2, %cst {dimension_numbers = #tpu.dot_dimension_numbers<[1], [0], [0], [1], [0, 0, 1, 1], [], []>} : vector<16x128xf32>, vector<128x128xf32>, vector<16x128xf32> -> vector<16x128xf32>
    %c0_4 = arith.constant 0 : index
    %c0_5 = arith.constant 0 : index
    %c0_6 = arith.constant 0 : index
    %4 = vector.load %arg3[%c0_4, %c0_5, %c0_6] : memref<5x1x128xf32, #tpu.memory_space<vmem>>, vector<1x1x128xf32>
    %5 = vector.shape_cast %4 : vector<1x1x128xf32> to vector<1x128xf32>
    %6 = vector.broadcast %5 : vector<1x128xf32> to vector<16x128xf32>
    %7 = arith.addf %3, %6 : vector<16x128xf32>
    %c0_7 = arith.constant 0 : index
    %c0_8 = arith.constant 0 : index
    %c0_9 = arith.constant 0 : index
    %8 = vector.load %arg5[%c0_7, %c0_8, %c0_9] : memref<3x16x128xf32, #tpu.memory_space<vmem>>, vector<1x16x128xf32>
    %9 = vector.shape_cast %8 : vector<1x16x128xf32> to vector<16x128xf32>
    %10 = vector.shape_cast %7 : vector<16x128xf32> to vector<1x16x128xf32>
    tpu.vector_store %arg5[%c0_7, %c0_8, %c0_9], %10 {strides = array<i32>} : memref<3x16x128xf32, #tpu.memory_space<vmem>>, vector<1x16x128xf32>,
    %c1 = arith.constant 1 : index
    %c0_10 = arith.constant 0 : index
    %c0_11 = arith.constant 0 : index
    %11 = vector.load %arg2[%c1, %c0_10, %c0_11] : memref<5x128x128xf32, #tpu.memory_space<vmem>>, vector<1x128x128xf32>
    %12 = vector.shape_cast %11 : vector<1x128x128xf32> to vector<128x128xf32>
    %cst_12 = arith.constant dense<0.000000e+00> : vector<16x128xf32>
    %13 = tpu.matmul %7, %12, %cst_12 {dimension_numbers = #tpu.dot_dimension_numbers<[1], [0], [0], [1], [0, 0, 1, 1], [], []>} : vector<16x128xf32>, vector<128x128xf32>, vector<16x128xf32> -> vector<16x128xf32>
    %c1_13 = arith.constant 1 : index
    %c0_14 = arith.constant 0 : index
    %c0_15 = arith.constant 0 : index
    %14 = vector.load %arg3[%c1_13, %c0_14, %c0_15] : memref<5x1x128xf32, #tpu.memory_space<vmem>>, vector<1x1x128xf32>
    %15 = vector.shape_cast %14 : vector<1x1x128xf32> to vector<1x128xf32>
    %16 = vector.broadcast %15 : vector<1x128xf32> to vector<16x128xf32>
    %17 = arith.addf %13, %16 : vector<16x128xf32>
    %cst_16 = arith.constant 0.000000e+00 : f32
    %18 = vector.broadcast %cst_16 : f32 to vector<16x128xf32>
    %19 = arith.maximumf %17, %18 : vector<16x128xf32>
    %c1_17 = arith.constant 1 : index
    %c0_18 = arith.constant 0 : index
    %c0_19 = arith.constant 0 : index
    %20 = vector.load %arg5[%c1_17, %c0_18, %c0_19] : memref<3x16x128xf32, #tpu.memory_space<vmem>>, vector<1x16x128xf32>
    %21 = vector.shape_cast %20 : vector<1x16x128xf32> to vector<16x128xf32>
    %22 = vector.shape_cast %19 : vector<16x128xf32> to vector<1x16x128xf32>
    tpu.vector_store %arg5[%c1_17, %c0_18, %c0_19], %22 {strides = array<i32>} : memref<3x16x128xf32, #tpu.memory_space<vmem>>, vector<1x16x128xf32>,
    %c2 = arith.constant 2 : index
    %c0_20 = arith.constant 0 : index
    %c0_21 = arith.constant 0 : index
    %23 = vector.load %arg2[%c2, %c0_20, %c0_21] : memref<5x128x128xf32, #tpu.memory_space<vmem>>, vector<1x128x128xf32>
    %24 = vector.shape_cast %23 : vector<1x128x128xf32> to vector<128x128xf32>
    %cst_22 = arith.constant dense<0.000000e+00> : vector<16x128xf32>
    %25 = tpu.matmul %19, %24, %cst_22 {dimension_numbers = #tpu.dot_dimension_numbers<[1], [0], [0], [1], [0, 0, 1, 1], [], []>} : vector<16x128xf32>, vector<128x128xf32>, vector<16x128xf32> -> vector<16x128xf32>
    %c2_23 = arith.constant 2 : index
    %c0_24 = arith.constant 0 : index
    %c0_25 = arith.constant 0 : index
    %26 = vector.load %arg3[%c2_23, %c0_24, %c0_25] : memref<5x1x128xf32, #tpu.memory_space<vmem>>, vector<1x1x128xf32>
    %27 = vector.shape_cast %26 : vector<1x1x128xf32> to vector<1x128xf32>
    %28 = vector.broadcast %27 : vector<1x128xf32> to vector<16x128xf32>
    %29 = arith.addf %25, %28 : vector<16x128xf32>
    %cst_26 = arith.constant 0.000000e+00 : f32
    %30 = vector.broadcast %cst_26 : f32 to vector<16x128xf32>
    %31 = arith.maximumf %29, %30 : vector<16x128xf32>
    %c2_27 = arith.constant 2 : index
    %c0_28 = arith.constant 0 : index
    %c0_29 = arith.constant 0 : index
    %32 = vector.load %arg5[%c2_27, %c0_28, %c0_29] : memref<3x16x128xf32, #tpu.memory_space<vmem>>, vector<1x16x128xf32>
    %33 = vector.shape_cast %32 : vector<1x16x128xf32> to vector<16x128xf32>
    %34 = vector.shape_cast %31 : vector<16x128xf32> to vector<1x16x128xf32>
    tpu.vector_store %arg5[%c2_27, %c0_28, %c0_29], %34 {strides = array<i32>} : memref<3x16x128xf32, #tpu.memory_space<vmem>>, vector<1x16x128xf32>,
    %c3 = arith.constant 3 : index
    %c0_30 = arith.constant 0 : index
    %c0_31 = arith.constant 0 : index
    %35 = vector.load %arg2[%c3, %c0_30, %c0_31] : memref<5x128x128xf32, #tpu.memory_space<vmem>>, vector<1x128x128xf32>
    %36 = vector.shape_cast %35 : vector<1x128x128xf32> to vector<128x128xf32>
    %cst_32 = arith.constant dense<0.000000e+00> : vector<16x128xf32>
    %37 = tpu.matmul %31, %36, %cst_32 {dimension_numbers = #tpu.dot_dimension_numbers<[1], [0], [0], [1], [0, 0, 1, 1], [], []>} : vector<16x128xf32>, vector<128x128xf32>, vector<16x128xf32> -> vector<16x128xf32>
    %c3_33 = arith.constant 3 : index
    %c0_34 = arith.constant 0 : index
    %c0_35 = arith.constant 0 : index
    %38 = vector.load %arg3[%c3_33, %c0_34, %c0_35] : memref<5x1x128xf32, #tpu.memory_space<vmem>>, vector<1x1x128xf32>
    %39 = vector.shape_cast %38 : vector<1x1x128xf32> to vector<1x128xf32>
    %40 = vector.broadcast %39 : vector<1x128xf32> to vector<16x128xf32>
    %41 = arith.addf %37, %40 : vector<16x128xf32>
    %cst_36 = arith.constant 0.000000e+00 : f32
    %42 = vector.broadcast %cst_36 : f32 to vector<16x128xf32>
    %43 = arith.maximumf %41, %42 : vector<16x128xf32>
    %c4 = arith.constant 4 : index
    %c0_37 = arith.constant 0 : index
    %c0_38 = arith.constant 0 : index
    %44 = vector.load %arg2[%c4, %c0_37, %c0_38] : memref<5x128x128xf32, #tpu.memory_space<vmem>>, vector<1x128x128xf32>
    %45 = vector.shape_cast %44 : vector<1x128x128xf32> to vector<128x128xf32>
    %cst_39 = arith.constant dense<0.000000e+00> : vector<16x128xf32>
    %46 = tpu.matmul %43, %45, %cst_39 {dimension_numbers = #tpu.dot_dimension_numbers<[1], [0], [0], [1], [0, 0, 1, 1], [], []>} : vector<16x128xf32>, vector<128x128xf32>, vector<16x128xf32> -> vector<16x128xf32>
    %c4_40 = arith.constant 4 : index
    %c0_41 = arith.constant 0 : index
    %c0_42 = arith.constant 0 : index
    %47 = vector.load %arg3[%c4_40, %c0_41, %c0_42] : memref<5x1x128xf32, #tpu.memory_space<vmem>>, vector<1x1x128xf32>
    %48 = vector.shape_cast %47 : vector<1x1x128xf32> to vector<1x128xf32>
    %49 = vector.broadcast %48 : vector<1x128xf32> to vector<16x128xf32>
    %50 = arith.addf %46, %49 : vector<16x128xf32>
    %c0_43 = arith.constant 0 : index
    %c0_44 = arith.constant 0 : index
    %51 = vector.load %arg4[%c0_43, %c0_44] : memref<16x128xf32, #tpu.memory_space<vmem>>, vector<16x128xf32>
    tpu.vector_store %arg4[%c0_43, %c0_44], %50 {strides = array<i32>} : memref<16x128xf32, #tpu.memory_space<vmem>>, vector<16x128xf32>,
    return
  }
  func.func @transform_0(%arg0: i32) -> (i32, i32) {
    %c0_i32 = arith.constant 0 : i32
    %c0_i32_0 = arith.constant 0 : i32
    return %arg0, %c0_i32 : i32, i32
  }
  func.func @transform_1(%arg0: i32) -> (i32, i32, i32) {
    %c0_i32 = arith.constant 0 : i32
    %c0_i32_0 = arith.constant 0 : i32
    %c0_i32_1 = arith.constant 0 : i32
    %c0_i32_2 = arith.constant 0 : i32
    return %c0_i32, %c0_i32_0, %c0_i32_1 : i32, i32, i32
  }
  func.func @transform_2(%arg0: i32) -> (i32, i32, i32) {
    %c0_i32 = arith.constant 0 : i32
    %c0_i32_0 = arith.constant 0 : i32
    %c0_i32_1 = arith.constant 0 : i32
    %c0_i32_2 = arith.constant 0 : i32
    return %c0_i32, %c0_i32_0, %c0_i32_1 : i32, i32, i32
  }
  func.func @transform_3(%arg0: i32) -> (i32, i32) {
    %c0_i32 = arith.constant 0 : i32
    %c0_i32_0 = arith.constant 0 : i32
    return %arg0, %c0_i32 : i32, i32
  }
  func.func @transform_4(%arg0: i32) -> (i32, i32, i32) {
    %c0_i32 = arith.constant 0 : i32
    %c0_i32_0 = arith.constant 0 : i32
    %c0_i32_1 = arith.constant 0 : i32
    return %c0_i32, %arg0, %c0_i32_0 : i32, i32, i32
  }
}

</mosaic_0001>

<llo_original>
// kernel: model_pipe_forward.1
$region0: #{model_pipe_forward.1}
  #allocation0 [shape = 'u32[]', space=smem, size = 0x4, offset = 0x4, fixed_abs, tag = 'smem constant byte address 0x4 - core index']
  #allocation1 [shape = 'u32[72,128]{1,0:T(1,128)}', space=vmem, size = 0x9000, scoped, tag = 'internal scratch']
  %s0 = inlined_call_operand.vmem [shape: f32[16,128], index: 0, kind: input, shape index: {}]
  %s1 = inlined_call_operand.vmem [shape: f32[5,128,128], index: 1, kind: input, shape index: {}]
  %s2 = inlined_call_operand.vmem [shape: f32[5,1,128], index: 2, kind: input, shape index: {}]
  %s3 = inlined_call_operand.hbm [shape: f32[16,128], index: 3, kind: output, shape index: {0}]
  %s4 = inlined_call_operand.hbm [shape: f32[3,16,128], index: 4, kind: output, shape index: {1}]
  %5 = xla_tuple %s3, %s4
  %s6 = sld [smem:[#allocation0]]
  $region30: #{model_pipe_forward.1} parent=0
    _
  %s8 = ssub.s32 1, %s6
  %s9 = scalar_select 0, %s8, %s6
  $region1: #{model_pipe_forward.1} parent=0
    #allocation2 [shape = 'u8[8192]{0}', space=vmem, size = 0x2000, scoped, tag = 'output window, operand 0, single buffered']
    #allocation3 [shape = 's32[1]{0}', space=sflag, size = 0x4, scoped, tag = 'scoped memory for model_pipe_forward.1']
    #allocation4 [shape = 'u8[24576]{0}', space=vmem, size = 0x6000, scoped, tag = 'output window, operand 1, single buffered']
    #allocation5 [shape = 's32[1]{0}', space=sflag, size = 0x4, scoped, tag = 'scoped memory for model_pipe_forward.1']
    %10 = vsyncpa [#allocation3], 0
    %11 = vsyncpa [#allocation5], 0
    // Predicated region
    $region2: #{model_pipe_forward.1} parent=1 // pred_check
      _
    $region3: #{model_pipe_forward.1} parent=1 // pred_check_branch
      %13 = sbr.rel (0) target = $region5
    $region4: #{model_pipe_forward.1} parent=1 // pred_region
      _
    $region5: #{model_pipe_forward.1} parent=1 // pred_fallthru
      _
    // Predicated region
    $region6: #{model_pipe_forward.1} parent=1 // pred_check
      _
    $region7: #{model_pipe_forward.1} parent=1 // pred_check_branch
      %15 = sbr.rel (0) target = $region9
    $region8: #{model_pipe_forward.1} parent=1 // pred_region
      _
    $region9: #{model_pipe_forward.1} parent=1 // pred_fallthru
      _
    // Predicated region
    $region10: #{model_pipe_forward.1} parent=1 // pred_check
      _
    $region11: #{model_pipe_forward.1} parent=1 // pred_check_branch
      %17 = sbr.rel (0) target = $region13
    $region12: #{model_pipe_forward.1} parent=1 // pred_region
      _
    $region13: #{model_pipe_forward.1} parent=1 // pred_fallthru
      _
    %v18 = vld [vmem:[%s0] sm:$0xff]
    %v19 = vld [vmem:[%s0 + $0x8] sm:$0xff]
    %v20 = vld [vmem:[%s1] sm:$0xff]
    %v21 = vld [vmem:[%s1 + $0x8] sm:$0xff]
    %v22 = vld [vmem:[%s1 + $0x10] sm:$0xff]
    %v23 = vld [vmem:[%s1 + $0x18] sm:$0xff]
    %v24 = vld [vmem:[%s1 + $0x20] sm:$0xff]
    %v25 = vld [vmem:[%s1 + $0x28] sm:$0xff]
    %v26 = vld [vmem:[%s1 + $0x30] sm:$0xff]
    %v27 = vld [vmem:[%s1 + $0x38] sm:$0xff]
    %v28 = vld [vmem:[%s1 + $0x40] sm:$0xff]
    %v29 = vld [vmem:[%s1 + $0x48] sm:$0xff]
    %v30 = vld [vmem:[%s1 + $0x50] sm:$0xff]
    %v31 = vld [vmem:[%s1 + $0x58] sm:$0xff]
    %v32 = vld [vmem:[%s1 + $0x60] sm:$0xff]
    %v33 = vld [vmem:[%s1 + $0x68] sm:$0xff]
    %v34 = vld [vmem:[%s1 + $0x70] sm:$0xff]
    %v35 = vld [vmem:[%s1 + $0x78] sm:$0xff]
    %v36 = vld [vmem:[%s2] sm:$0x1]
    %v38 = vperm.slane %v36, 0
    %40 = vmatpush.msra.mxu0 %v35
    %41 = vmatpush.msra.mxu0 %v34
    %42 = vmatpush.msra.mxu0 %v33
    %43 = vmatpush.msra.mxu0 %v32
    %44 = vmatpush.msra.mxu0 %v31
    %45 = vmatpush.msra.mxu0 %v30
    %46 = vmatpush.msra.mxu0 %v29
    %47 = vmatpush.msra.mxu0 %v28
    %48 = vmatpush.msra.mxu0 %v27
    %49 = vmatpush.msra.mxu0 %v26
    %50 = vmatpush.msra.mxu0 %v25
    %51 = vmatpush.msra.mxu0 %v24
    %52 = vmatpush.msra.mxu0 %v23
    %53 = vmatpush.msra.mxu0 %v22
    %54 = vmatpush.msra.mxu0 %v21
    %55 = vmatpush.msra.mxu0 %v20
    %56 = vmatmul.f32.gmra.mxu0 %v18
    %v57 = vpop.f32.mrf.mxu0
    %v58 = vadd.f32 %v38, %v57
    %59 = vmatmul.f32.gmra.mxu0 %v19
    %v60 = vpop.f32.mrf.mxu0
    %v61 = vadd.f32 %v38, %v60
    %62 = vdwg.mxu0
    %63 = vst [vmem:[#allocation4] sm:$0xff] %v58
    %64 = vst [vmem:[#allocation4 + $0x8] sm:$0xff] %v61
    %s65 = scalar_lea.vmem %s1, 128
    %v66 = vld [vmem:[%s65] sm:$0xff]
    %v67 = vld [vmem:[%s65 + $0x8] sm:$0xff]
    %v68 = vld [vmem:[%s65 + $0x10] sm:$0xff]
    %v69 = vld [vmem:[%s65 + $0x18] sm:$0xff]
    %v70 = vld [vmem:[%s65 + $0x20] sm:$0xff]
    %v71 = vld [vmem:[%s65 + $0x28] sm:$0xff]
    %v72 = vld [vmem:[%s65 + $0x30] sm:$0xff]
    %v73 = vld [vmem:[%s65 + $0x38] sm:$0xff]
    %v74 = vld [vmem:[%s65 + $0x40] sm:$0xff]
    %v75 = vld [vmem:[%s65 + $0x48] sm:$0xff]
    %v76 = vld [vmem:[%s65 + $0x50] sm:$0xff]
    %v77 = vld [vmem:[%s65 + $0x58] sm:$0xff]
    %v78 = vld [vmem:[%s65 + $0x60] sm:$0xff]
    %v79 = vld [vmem:[%s65 + $0x68] sm:$0xff]
    %v80 = vld [vmem:[%s65 + $0x70] sm:$0xff]
    %v81 = vld [vmem:[%s65 + $0x78] sm:$0xff]
    %s82 = scalar_lea.vmem %s2, 1
    %v83 = vld [vmem:[%s82] sm:$0x1]
    %v85 = vperm.slane %v83, 0
    %87 = vmatpush.msra.mxu0 %v81
    %88 = vmatpush.msra.mxu0 %v80
    %89 = vmatpush.msra.mxu0 %v79
    %90 = vmatpush.msra.mxu0 %v78
    %91 = vmatpush.msra.mxu0 %v77
    %92 = vmatpush.msra.mxu0 %v76
    %93 = vmatpush.msra.mxu0 %v75
    %94 = vmatpush.msra.mxu0 %v74
    %95 = vmatpush.msra.mxu0 %v73
    %96 = vmatpush.msra.mxu0 %v72
    %97 = vmatpush.msra.mxu0 %v71
    %98 = vmatpush.msra.mxu0 %v70
    %99 = vmatpush.msra.mxu0 %v69
    %100 = vmatpush.msra.mxu0 %v68
    %101 = vmatpush.msra.mxu0 %v67
    %102 = vmatpush.msra.mxu0 %v66
    %103 = vmatmul.f32.gmra.mxu0 %v58
    %v104 = vpop.f32.mrf.mxu0
    %v105 = vadd.f32 %v85, %v104
    %106 = vmatmul.f32.gmra.mxu0 %v61
    %v107 = vpop.f32.mrf.mxu0
    %v108 = vadd.f32 %v85, %v107
    %109 = vdwg.mxu0
    %v110 = vmax.f32 %v105, 0.0
    %v111 = vmax.f32 %v108, 0.0
    %s112 = scalar_lea.vmem [#allocation4], 16
    %113 = vst [vmem:[%s112] sm:$0xff] %v110
    %114 = vst [vmem:[%s112 + $0x8] sm:$0xff] %v111
    %s115 = scalar_lea.vmem %s1, 256
    %v116 = vld [vmem:[%s115] sm:$0xff]
    %v117 = vld [vmem:[%s115 + $0x8] sm:$0xff]
    %v118 = vld [vmem:[%s115 + $0x10] sm:$0xff]
    %v119 = vld [vmem:[%s115 + $0x18] sm:$0xff]
    %v120 = vld [vmem:[%s115 + $0x20] sm:$0xff]
    %v121 = vld [vmem:[%s115 + $0x28] sm:$0xff]
    %v122 = vld [vmem:[%s115 + $0x30] sm:$0xff]
    %v123 = vld [vmem:[%s115 + $0x38] sm:$0xff]
    %v124 = vld [vmem:[%s115 + $0x40] sm:$0xff]
    %v125 = vld [vmem:[%s115 + $0x48] sm:$0xff]
    %v126 = vld [vmem:[%s115 + $0x50] sm:$0xff]
    %v127 = vld [vmem:[%s115 + $0x58] sm:$0xff]
    %v128 = vld [vmem:[%s115 + $0x60] sm:$0xff]
    %v129 = vld [vmem:[%s115 + $0x68] sm:$0xff]
    %v130 = vld [vmem:[%s115 + $0x70] sm:$0xff]
    %v131 = vld [vmem:[%s115 + $0x78] sm:$0xff]
    %s132 = scalar_lea.vmem %s2, 2
    %v133 = vld [vmem:[%s132] sm:$0x1]
    %v135 = vperm.slane %v133, 0
    %137 = vmatpush.msra.mxu0 %v131
    %138 = vmatpush.msra.mxu0 %v130
    %139 = vmatpush.msra.mxu0 %v129
    %140 = vmatpush.msra.mxu0 %v128
    %141 = vmatpush.msra.mxu0 %v127
    %142 = vmatpush.msra.mxu0 %v126
    %143 = vmatpush.msra.mxu0 %v125
    %144 = vmatpush.msra.mxu0 %v124
    %145 = vmatpush.msra.mxu0 %v123
    %146 = vmatpush.msra.mxu0 %v122
    %147 = vmatpush.msra.mxu0 %v121
    %148 = vmatpush.msra.mxu0 %v120
    %149 = vmatpush.msra.mxu0 %v119
    %150 = vmatpush.msra.mxu0 %v118
    %151 = vmatpush.msra.mxu0 %v117
    %152 = vmatpush.msra.mxu0 %v116
    %153 = vmatmul.f32.gmra.mxu0 %v110
    %v154 = vpop.f32.mrf.mxu0
    %v155 = vadd.f32 %v135, %v154
    %156 = vmatmul.f32.gmra.mxu0 %v111
    %v157 = vpop.f32.mrf.mxu0
    %v158 = vadd.f32 %v135, %v157
    %159 = vdwg.mxu0
    %v160 = vmax.f32 %v155, 0.0
    %v161 = vmax.f32 %v158, 0.0
    %s162 = scalar_lea.vmem [#allocation4], 32
    %163 = vst [vmem:[%s162] sm:$0xff] %v160
    %164 = vst [vmem:[%s162 + $0x8] sm:$0xff] %v161
    %s165 = scalar_lea.vmem %s1, 384
    %v166 = vld [vmem:[%s165] sm:$0xff]
    %v167 = vld [vmem:[%s165 + $0x8] sm:$0xff]
    %v168 = vld [vmem:[%s165 + $0x10] sm:$0xff]
    %v169 = vld [vmem:[%s165 + $0x18] sm:$0xff]
    %v170 = vld [vmem:[%s165 + $0x20] sm:$0xff]
    %v171 = vld [vmem:[%s165 + $0x28] sm:$0xff]
    %v172 = vld [vmem:[%s165 + $0x30] sm:$0xff]
    %v173 = vld [vmem:[%s165 + $0x38] sm:$0xff]
    %v174 = vld [vmem:[%s165 + $0x40] sm:$0xff]
    %v175 = vld [vmem:[%s165 + $0x48] sm:$0xff]
    %v176 = vld [vmem:[%s165 + $0x50] sm:$0xff]
    %v177 = vld [vmem:[%s165 + $0x58] sm:$0xff]
    %v178 = vld [vmem:[%s165 + $0x60] sm:$0xff]
    %v179 = vld [vmem:[%s165 + $0x68] sm:$0xff]
    %v180 = vld [vmem:[%s165 + $0x70] sm:$0xff]
    %v181 = vld [vmem:[%s165 + $0x78] sm:$0xff]
    %s182 = scalar_lea.vmem %s2, 3
    %v183 = vld [vmem:[%s182] sm:$0x1]
    %v185 = vperm.slane %v183, 0
    %187 = vmatpush.msra.mxu0 %v181
    %188 = vmatpush.msra.mxu0 %v180
    %189 = vmatpush.msra.mxu0 %v179
    %190 = vmatpush.msra.mxu0 %v178
    %191 = vmatpush.msra.mxu0 %v177
    %192 = vmatpush.msra.mxu0 %v176
    %193 = vmatpush.msra.mxu0 %v175
    %194 = vmatpush.msra.mxu0 %v174
    %195 = vmatpush.msra.mxu0 %v173
    %196 = vmatpush.msra.mxu0 %v172
    %197 = vmatpush.msra.mxu0 %v171
    %198 = vmatpush.msra.mxu0 %v170
    %199 = vmatpush.msra.mxu0 %v169
    %200 = vmatpush.msra.mxu0 %v168
    %201 = vmatpush.msra.mxu0 %v167
    %202 = vmatpush.msra.mxu0 %v166
    %203 = vmatmul.f32.gmra.mxu0 %v160
    %v204 = vpop.f32.mrf.mxu0
    %v205 = vadd.f32 %v185, %v204
    %206 = vmatmul.f32.gmra.mxu0 %v161
    %v207 = vpop.f32.mrf.mxu0
    %v208 = vadd.f32 %v185, %v207
    %209 = vdwg.mxu0
    %v210 = vmax.f32 %v205, 0.0
    %v211 = vmax.f32 %v208, 0.0
    %s212 = scalar_lea.vmem %s1, 512
    %v213 = vld [vmem:[%s212] sm:$0xff]
    %v214 = vld [vmem:[%s212 + $0x8] sm:$0xff]
    %v215 = vld [vmem:[%s212 + $0x10] sm:$0xff]
    %v216 = vld [vmem:[%s212 + $0x18] sm:$0xff]
    %v217 = vld [vmem:[%s212 + $0x20] sm:$0xff]
    %v218 = vld [vmem:[%s212 + $0x28] sm:$0xff]
    %v219 = vld [vmem:[%s212 + $0x30] sm:$0xff]
    %v220 = vld [vmem:[%s212 + $0x38] sm:$0xff]
    %v221 = vld [vmem:[%s212 + $0x40] sm:$0xff]
    %v222 = vld [vmem:[%s212 + $0x48] sm:$0xff]
    %v223 = vld [vmem:[%s212 + $0x50] sm:$0xff]
    %v224 = vld [vmem:[%s212 + $0x58] sm:$0xff]
    %v225 = vld [vmem:[%s212 + $0x60] sm:$0xff]
    %v226 = vld [vmem:[%s212 + $0x68] sm:$0xff]
    %v227 = vld [vmem:[%s212 + $0x70] sm:$0xff]
    %v228 = vld [vmem:[%s212 + $0x78] sm:$0xff]
    %s229 = scalar_lea.vmem %s2, 4
    %v230 = vld [vmem:[%s229] sm:$0x1]
    %v232 = vperm.slane %v230, 0
    %234 = vmatpush.msra.mxu0 %v228
    %235 = vmatpush.msra.mxu0 %v227
    %236 = vmatpush.msra.mxu0 %v226
    %237 = vmatpush.msra.mxu0 %v225
    %238 = vmatpush.msra.mxu0 %v224
    %239 = vmatpush.msra.mxu0 %v223
    %240 = vmatpush.msra.mxu0 %v222
    %241 = vmatpush.msra.mxu0 %v221
    %242 = vmatpush.msra.mxu0 %v220
    %243 = vmatpush.msra.mxu0 %v219
    %244 = vmatpush.msra.mxu0 %v218
    %245 = vmatpush.msra.mxu0 %v217
    %246 = vmatpush.msra.mxu0 %v216
    %247 = vmatpush.msra.mxu0 %v215
    %248 = vmatpush.msra.mxu0 %v214
    %249 = vmatpush.msra.mxu0 %v213
    %250 = vmatmul.f32.gmra.mxu0 %v210
    %v251 = vpop.f32.mrf.mxu0
    %v252 = vadd.f32 %v232, %v251
    %253 = vmatmul.f32.gmra.mxu0 %v211
    %v254 = vpop.f32.mrf.mxu0
    %v255 = vadd.f32 %v232, %v254
    %256 = vdwg.mxu0
    %257 = vst [vmem:[#allocation2] sm:$0xff] %v252
    %258 = vst [vmem:[#allocation2 + $0x8] sm:$0xff] %v255
    // Predicated region
    $region14: #{model_pipe_forward.1} parent=1 // pred_check
      _
    $region15: #{model_pipe_forward.1} parent=1 // pred_check_branch
      %260 = sbr.rel (0) target = $region17
    $region16: #{model_pipe_forward.1} parent=1 // pred_region
      %262 = vsyncadd [#allocation3], 0
      %s263 = sshll.u32 [#allocation2], 4
      %s264 = int_to_ptr.vmem [resolvable:$true] %s263
      %s265 = sshll.u32 %s3, 4
      %s266 = int_to_ptr.hbm [resolvable:$true] %s265
      %271 = dma.vmem_to_hbm [thread:$0]  %s264, 256, %s266, [#allocation3], 128, 128, 8
    $region17: #{model_pipe_forward.1} parent=1 // pred_fallthru
      _
    // Predicated region
    $region18: #{model_pipe_forward.1} parent=1 // pred_check
      _
    $region19: #{model_pipe_forward.1} parent=1 // pred_check_branch
      %273 = sbr.rel (0) target = $region21
    $region20: #{model_pipe_forward.1} parent=1 // pred_region
      %275 = vsyncadd [#allocation5], 0
      %s276 = sshll.u32 [#allocation4], 4
      %s277 = int_to_ptr.vmem [resolvable:$true] %s276
      %s278 = sshll.u32 %s4, 4
      %s279 = int_to_ptr.hbm [resolvable:$true] %s278
      %284 = dma.vmem_to_hbm [thread:$0]  %s277, 768, %s279, [#allocation5], 128, 128, 8
    $region21: #{model_pipe_forward.1} parent=1 // pred_fallthru
      _
    // Predicated region
    $region22: #{model_pipe_forward.1} parent=1 // pred_check
      _
    $region23: #{model_pipe_forward.1} parent=1 // pred_check_branch
      %286 = sbr.rel (0) target = $region25
    $region24: #{model_pipe_forward.1} parent=1 // pred_region
      %288 = dma.done [#allocation3], 256
    $region25: #{model_pipe_forward.1} parent=1 // pred_fallthru
      _
    // Predicated region
    $region26: #{model_pipe_forward.1} parent=1 // pred_check
      _
    $region27: #{model_pipe_forward.1} parent=1 // pred_check_branch
      %290 = sbr.rel (0) target = $region29
    $region28: #{model_pipe_forward.1} parent=1 // pred_region
      %292 = dma.done [#allocation5], 768
    $region29: #{model_pipe_forward.1} parent=1 // pred_fallthru
      _
    %293 = vsyncpa [#allocation3], 1
    %294 = vsyncpa [#allocation5], 1

</llo_original>
